<compile_context>
chip_gen: v5e
topology: v5e:2x2
jax: 0.10.0
libtpu: 0.0.40
codegen_flags: <defaults>
</compile_context>

<pallas_src>
import functools

import jax
import jax.numpy as jnp
from jax import lax
from jax.experimental import pallas as pl
from jax.experimental.pallas import tpu as pltpu

EPS = 1e-5

# v7x-safe scoped VMEM budget (64 MiB physical there, 128 MiB on v5e/v6e);
# explicit so the 16 MiB v5e scoped default never caps the pipeline.
VMEM_LIMIT_BYTES = 48 * 1024 * 1024
# Per-block budget in ELEMENTS (~6 MiB of f32 per block-sized temporary), so
# in-kernel f32 casts / x*x stay inside VMEM_LIMIT_BYTES for any input dtype.
BLOCK_ELEMS = (6 * 1024 * 1024) // 4
# Largest tensor (elements) handled by the fused single-pass path.
FUSED_MAX_ELEMS = (4 * 1024 * 1024) // 4


def _round_up(x, m):
    return ((x + m - 1) // m) * m


def _choose_tiles(N, C, L2):
    """Pick (batch tile, lane tile). Shrink lanes before batch, prefer tn >= 8."""
    lane = 128
    L2r = _round_up(L2, lane)
    tn_pref = min(N, 8)
    max_t2l = max(lane, (BLOCK_ELEMS // max(1, tn_pref * C)) // lane * lane)
    n_lt = -(-L2r // max_t2l)                       # lane tiles
    t2l = _round_up(-(-L2r // n_lt), lane)          # balanced -> minimal padding
    tn_max = max(1, min(N, BLOCK_ELEMS // max(1, C * t2l)))
    n_bt = -(-N // tn_max)                          # batch tiles
    tn = -(-N // n_bt)
    return tn, t2l


def _stats_kernel(x_ref, stats_ref):
    # x_ref: (tn, C, t2l); stats_ref: (1, 4, C) f32 per-batch-tile partial
    # accumulator, resident across the lane-tile axis.
    # rows: 0 = sum_re, 1 = sum_im, 2 = sumsq_re, 3 = sumsq_im
    @pl.when(pl.program_id(1) == 0)
    def _():
        stats_ref[...] = jnp.zeros_like(stats_ref)

    x = x_ref[...].astype(jnp.float32)              # (tn, C, t2l)
    xs = jnp.sum(x, axis=0)                         # (C, t2l)
    qs = jnp.sum(x * x, axis=0)                     # (C, t2l)

    # Even lanes = real part, odd lanes = imag part (native (..., L, 2) layout).
    is_re = (lax.broadcasted_iota(jnp.int32, xs.shape, 1) & 1) == 0
    zero = jnp.zeros_like(xs)

    s_re = jnp.sum(jnp.where(is_re, xs, zero), axis=1)   # (C,)
    s_all = jnp.sum(xs, axis=1)
    q_re = jnp.sum(jnp.where(is_re, qs, zero), axis=1)
    q_all = jnp.sum(qs, axis=1)

    # Single full-block accumulator update (no sublane-sliced RMWs).
    upd = jnp.stack([s_re, s_all - s_re, q_re, q_all - q_re], axis=0)  # (4, C)
    stats_ref[...] += upd[None, :, :]


def _norm_kernel(x_ref, scale_ref, shift_ref, o_ref):
    # x_ref/o_ref: (tn, C, t2l); scale_ref/shift_ref: (2, C) f32 (row0=re, row1=im).
    x = x_ref[...].astype(jnp.float32)
    _, c, t2l = x_ref.shape
    is_re = (lax.broadcasted_iota(jnp.int32, (c, t2l), 1) & 1) == 0
    sc = jnp.where(is_re, scale_ref[0, :][:, None], scale_ref[1, :][:, None])
    sh = jnp.where(is_re, shift_ref[0, :][:, None], shift_ref[1, :][:, None])
    o_ref[...] = (x * sc[None, :, :] + sh[None, :, :]).astype(o_ref.dtype)


def _fused_kernel(x_ref, w_ref, b_ref, o_ref, *, inv_count, eps):
    # Whole tensor resident: x_ref/o_ref: (N, C, L2); w_ref/b_ref: (2, C) f32.
    x = x_ref[...].astype(jnp.float32)
    _, c, l2 = x_ref.shape

    xs = jnp.sum(x, axis=0)                         # (C, L2)
    qs = jnp.sum(x * x, axis=0)
    is_re = (lax.broadcasted_iota(jnp.int32, (c, l2), 1) & 1) == 0
    zero = jnp.zeros_like(xs)

    s_re = jnp.sum(jnp.where(is_re, xs, zero), axis=1)
    s_all = jnp.sum(xs, axis=1)
    q_re = jnp.sum(jnp.where(is_re, qs, zero), axis=1)
    q_all = jnp.sum(qs, axis=1)
    s_im = s_all - s_re
    q_im = q_all - q_re

    mean_re = s_re * inv_count
    mean_im = s_im * inv_count
    var_re = jnp.maximum(q_re * inv_count - mean_re * mean_re, 0.0)
    var_im = jnp.maximum(q_im * inv_count - mean_im * mean_im, 0.0)
    inv_re = lax.rsqrt(var_re + eps)
    inv_im = lax.rsqrt(var_im + eps)

    scale_re = w_ref[0, :] * inv_re
    scale_im = w_ref[1, :] * inv_im
    shift_re = b_ref[0, :] - mean_re * scale_re
    shift_im = b_ref[1, :] - mean_im * scale_im

    sc = jnp.where(is_re, scale_re[:, None], scale_im[:, None])
    sh = jnp.where(is_re, shift_re[:, None], shift_im[:, None])
    o_ref[...] = (x * sc[None, :, :] + sh[None, :, :]).astype(o_ref.dtype)


def complex_batchnorm1d(x, weight, bias, *, eps=EPS, force_two_pass=False):
    """x: (N, C, L, 2) ; weight, bias: (2, C) for (real, imag) branches."""
    N, C, L, two = x.shape
    assert two == 2
    L2 = 2 * L
    itemsize = jnp.dtype(x.dtype).itemsize

    # Free contiguous reshape: real/imag interleave on the lane axis.
    x2 = x.reshape(N, C, L2)
    w = weight.astype(jnp.float32).reshape(2, C)
    b = bias.astype(jnp.float32).reshape(2, C)
    inv_count = 1.0 / float(N * L)

    # ---- Fused single-pass fast path (tensor + f32 temps fit in VMEM). ----
    if (not force_two_pass) and N * C * L2 <= FUSED_MAX_ELEMS:
        out2 = pl.pallas_call(
            functools.partial(_fused_kernel, inv_count=inv_count, eps=float(eps)),
            out_shape=jax.ShapeDtypeStruct((N, C, L2), x.dtype),
            grid_spec=pltpu.PrefetchScalarGridSpec(
                num_scalar_prefetch=0,
                grid=(1,),
                in_specs=[pl.BlockSpec((N, C, L2), lambda i: (0, 0, 0)),
                          pl.BlockSpec((2, C), lambda i: (0, 0)),
                          pl.BlockSpec((2, C), lambda i: (0, 0))],
                out_specs=pl.BlockSpec((N, C, L2), lambda i: (0, 0, 0)),
            ),
            compiler_params=pltpu.CompilerParams(
                dimension_semantics=("arbitrary",),
                vmem_limit_bytes=VMEM_LIMIT_BYTES),
        )(x2, w, b)
        return out2.reshape(N, C, L, 2)

    # ---- Two streaming passes over HBM. ----
    tn, t2l = _choose_tiles(N, C, L2)
    N_pad = _round_up(N, tn)
    L2_pad = _round_up(L2, t2l)
    if N_pad != N or L2_pad != L2:
        # Zero padding is exact for the stats (adds 0 to sum / sum-of-squares;
        # the true count N*L is used for the mean). Padded outputs are sliced.
        x2p = jnp.pad(x2, ((0, N_pad - N), (0, 0), (0, L2_pad - L2)))
    else:
        x2p = x2
    grid_n = N_pad // tn
    grid = (grid_n, L2_pad // t2l)

    # Pass 1: per-batch-tile partial sums / sums-of-squares (real & imag).
    # Batch axis "parallel" so v7x can shard pass 1 across both TensorCores.
    partials = pl.pallas_call(
        _stats_kernel,
        out_shape=jax.ShapeDtypeStruct((grid_n, 4, C), jnp.float32),
        grid_spec=pltpu.PrefetchScalarGridSpec(
            num_scalar_prefetch=0,
            grid=grid,
            in_specs=[pl.BlockSpec((tn, C, t2l), lambda i, j: (i, 0, j))],
            out_specs=pl.BlockSpec((1, 4, C), lambda i, j: (i, 0, 0)),
        ),
        compiler_params=pltpu.CompilerParams(
            dimension_semantics=("parallel", "arbitrary"),
            vmem_limit_bytes=VMEM_LIMIT_BYTES),
        cost_estimate=pl.CostEstimate(
            flops=6 * N_pad * C * L2_pad,
            transcendentals=0,
            bytes_accessed=N_pad * C * L2_pad * itemsize + grid_n * 4 * C * 4),
    )(x2p)

    # Tiny O(C) wrapper math: reduce partials, biased var (clamped), affine fold.
    stats = jnp.sum(partials, axis=0)                       # (4, C)
    mean = stats[0:2] * inv_count                           # (2, C)
    var = jnp.maximum(stats[2:4] * inv_count - mean * mean, 0.0)
    inv_std = lax.rsqrt(var + eps)
    scale = w * inv_std                                     # (2, C)
    shift = b - mean * scale

    # Pass 2: normalize; per-lane (re/im) scale/shift built in-kernel from (2, C).
    out2 = pl.pallas_call(
        _norm_kernel,
        out_shape=jax.ShapeDtypeStruct((N_pad, C, L2_pad), x.dtype),
        grid_spec=pltpu.PrefetchScalarGridSpec(
            num_scalar_prefetch=0,
            grid=grid,
            in_specs=[
                pl.BlockSpec((tn, C, t2l), lambda i, j: (i, 0, j)),
                pl.BlockSpec((2, C), lambda i, j: (0, 0)),
                pl.BlockSpec((2, C), lambda i, j: (0, 0)),
            ],
            out_specs=pl.BlockSpec((tn, C, t2l), lambda i, j: (i, 0, j)),
        ),
        compiler_params=pltpu.CompilerParams(
            dimension_semantics=("parallel", "parallel"),
            vmem_limit_bytes=VMEM_LIMIT_BYTES),
        cost_estimate=pl.CostEstimate(
            flops=2 * N_pad * C * L2_pad,
            transcendentals=0,
            bytes_accessed=2 * N_pad * C * L2_pad * itemsize),
    )(x2p, scale, shift)

    if N_pad != N or L2_pad != L2:
        out2 = out2[:N, :, :L2]
    return out2.reshape(N, C, L, 2)


def _reference(x, weight, bias, eps=EPS):
    outs = []
    for p in range(2):
        xp = x[..., p].astype(jnp.float32)                  # (N, C, L)
        mean = jnp.mean(xp, axis=(0, 2), keepdims=True)
        var = jnp.mean((xp - mean) ** 2, axis=(0, 2), keepdims=True)
        y = (xp - mean) / jnp.sqrt(var + eps)
        y = y * weight[p][None, :, None] + bias[p][None, :, None]
        outs.append(y.astype(x.dtype))
    return jnp.stack(outs, axis=-1)


if __name__ == "__main__":
    k1, k2 = jax.random.split(jax.random.PRNGKey(0))

    # Case 1: small shape (exercises the fused single-pass path and, forced,
    # the two-pass streaming path with lane padding 32 -> 128).
    N, C, L = 2, 4, 16
    x = jax.random.normal(k1, (N, C, L, 2), dtype=jnp.float32)
    weight = 1.0 + 0.1 * jnp.arange(2 * C, dtype=jnp.float32).reshape(2, C)
    bias = 0.01 * jnp.arange(2 * C, dtype=jnp.float32).reshape(2, C)
    ref = _reference(x, weight, bias)

    out_fused = jax.block_until_ready(complex_batchnorm1d(x, weight, bias))
    assert out_fused.shape == (N, C, L, 2)
    assert jnp.allclose(out_fused, ref, atol=2e-5, rtol=2e-5)

    out_stream = jax.block_until_ready(
        complex_batchnorm1d(x, weight, bias, force_two_pass=True))
    assert jnp.allclose(out_stream, ref, atol=2e-5, rtol=2e-5)

    # Case 2: awkward (non-divisor) shape exercising batch/lane padding.
    N2, C2, L2_ = 3, 4, 100
    x_b = jax.random.normal(k2, (N2, C2, L2_, 2), dtype=jnp.float32)
    w_b = 1.0 + 0.05 * jnp.arange(2 * C2, dtype=jnp.float32).reshape(2, C2)
    b_b = 0.02 * jnp.arange(2 * C2, dtype=jnp.float32).reshape(2, C2)
    ref_b = _reference(x_b, w_b, b_b)
    out_b = jax.block_until_ready(
        complex_batchnorm1d(x_b, w_b, b_b, force_two_pass=True))
    assert jnp.allclose(out_b, ref_b, atol=2e-5, rtol=2e-5)

    print("KERNEL_OK")
</pallas_src>

<mosaic_0001>
module attributes {stable_mosaic.version = 11 : i64} {
  func.func @_fused_kernel(%arg0: i32, %arg1: memref<2x4x32xf32, #tpu.memory_space<vmem>>, %arg2: memref<2x4xf32, #tpu.memory_space<vmem>>, %arg3: memref<2x4xf32, #tpu.memory_space<vmem>>, %arg4: memref<2x4x32xf32, #tpu.memory_space<vmem>>) attributes {dimension_semantics = [#tpu.dimension_semantics<arbitrary>], iteration_bounds = array<i64: 1>, scalar_prefetch = 0 : i64, scratch_operands = 0 : i64, tpu.core_type = #tpu.core_type<tc>, window_params = [{pipeline_mode = #tpu.pipeline_mode<synchronous>, transform_indices = @transform_0, window_bounds = array<i64: 2, 4, 32>}, {pipeline_mode = #tpu.pipeline_mode<synchronous>, transform_indices = @transform_1, window_bounds = array<i64: 2, 4>}, {pipeline_mode = #tpu.pipeline_mode<synchronous>, transform_indices = @transform_2, window_bounds = array<i64: 2, 4>}, {pipeline_mode = #tpu.pipeline_mode<synchronous>, transform_indices = @transform_3, window_bounds = array<i64: 2, 4, 32>}]} {
    %c0 = arith.constant 0 : index
    %c0_0 = arith.constant 0 : index
    %c0_1 = arith.constant 0 : index
    %0 = vector.load %arg1[%c0, %c0_0, %c0_1] : memref<2x4x32xf32, #tpu.memory_space<vmem>>, vector<2x4x32xf32>
    %cst = arith.constant dense<0.000000e+00> : vector<4x32xf32>
    %1 = vector.multi_reduction <add>, %0, %cst [0] : vector<2x4x32xf32> to vector<4x32xf32>
    %2 = arith.mulf %0, %0 : vector<2x4x32xf32>
    %cst_2 = arith.constant dense<0.000000e+00> : vector<4x32xf32>
    %3 = vector.multi_reduction <add>, %2, %cst_2 [0] : vector<2x4x32xf32> to vector<4x32xf32>
    %4 = tpu.iota {dimensions = array<i32: 1>} : vector<4x32xi32>
    %c1_i32 = arith.constant 1 : i32
    %5 = vector.broadcast %c1_i32 : i32 to vector<4x32xi32>
    %6 = arith.andi %4, %5 : vector<4x32xi32>
    %c0_i32 = arith.constant 0 : i32
    %7 = vector.broadcast %c0_i32 : i32 to vector<4x32xi32>
    %8 = arith.cmpi eq, %6, %7 : vector<4x32xi32>
    %cst_3 = arith.constant 0.000000e+00 : f32
    %9 = vector.broadcast %cst_3 : f32 to vector<4x32xf32>
    %10 = arith.select %8, %1, %9 : vector<4x32xi1>, vector<4x32xf32>
    %cst_4 = arith.constant dense<0.000000e+00> : vector<4xf32>
    %11 = vector.multi_reduction <add>, %10, %cst_4 [1] : vector<4x32xf32> to vector<4xf32>
    %cst_5 = arith.constant dense<0.000000e+00> : vector<4xf32>
    %12 = vector.multi_reduction <add>, %1, %cst_5 [1] : vector<4x32xf32> to vector<4xf32>
    %13 = arith.select %8, %3, %9 : vector<4x32xi1>, vector<4x32xf32>
    %cst_6 = arith.constant dense<0.000000e+00> : vector<4xf32>
    %14 = vector.multi_reduction <add>, %13, %cst_6 [1] : vector<4x32xf32> to vector<4xf32>
    %cst_7 = arith.constant dense<0.000000e+00> : vector<4xf32>
    %15 = vector.multi_reduction <add>, %3, %cst_7 [1] : vector<4x32xf32> to vector<4xf32>
    %16 = arith.subf %12, %11 : vector<4xf32>
    %17 = arith.subf %15, %14 : vector<4xf32>
    %cst_8 = arith.constant 3.125000e-02 : f32
    %18 = vector.broadcast %cst_8 : f32 to vector<4xf32>
    %19 = arith.mulf %11, %18 : vector<4xf32>
    %cst_9 = arith.constant 3.125000e-02 : f32
    %20 = vector.broadcast %cst_9 : f32 to vector<4xf32>
    %21 = arith.mulf %16, %20 : vector<4xf32>
    %cst_10 = arith.constant 3.125000e-02 : f32
    %22 = vector.broadcast %cst_10 : f32 to vector<4xf32>
    %23 = arith.mulf %14, %22 : vector<4xf32>
    %24 = arith.mulf %19, %19 : vector<4xf32>
    %25 = arith.subf %23, %24 : vector<4xf32>
    %cst_11 = arith.constant 0.000000e+00 : f32
    %26 = vector.broadcast %cst_11 : f32 to vector<4xf32>
    %27 = arith.maximumf %25, %26 : vector<4xf32>
    %cst_12 = arith.constant 3.125000e-02 : f32
    %28 = vector.broadcast %cst_12 : f32 to vector<4xf32>
    %29 = arith.mulf %17, %28 : vector<4xf32>
    %30 = arith.mulf %21, %21 : vector<4xf32>
    %31 = arith.subf %29, %30 : vector<4xf32>
    %cst_13 = arith.constant 0.000000e+00 : f32
    %32 = vector.broadcast %cst_13 : f32 to vector<4xf32>
    %33 = arith.maximumf %31, %32 : vector<4xf32>
    %cst_14 = arith.constant 9.99999974E-6 : f32
    %34 = vector.broadcast %cst_14 : f32 to vector<4xf32>
    %35 = arith.addf %27, %34 : vector<4xf32>
    %36 = math.rsqrt %35 : vector<4xf32>
    %cst_15 = arith.constant 9.99999974E-6 : f32
    %37 = vector.broadcast %cst_15 : f32 to vector<4xf32>
    %38 = arith.addf %33, %37 : vector<4xf32>
    %39 = math.rsqrt %38 : vector<4xf32>
    %c0_16 = arith.constant 0 : index
    %c0_17 = arith.constant 0 : index
    %40 = vector.load %arg2[%c0_16, %c0_17] : memref<2x4xf32, #tpu.memory_space<vmem>>, vector<1x4xf32>
    %41 = vector.shape_cast %40 : vector<1x4xf32> to vector<4xf32>
    %42 = arith.mulf %41, %36 : vector<4xf32>
    %c1 = arith.constant 1 : index
    %c0_18 = arith.constant 0 : index
    %43 = vector.load %arg2[%c1, %c0_18] : memref<2x4xf32, #tpu.memory_space<vmem>>, vector<1x4xf32>
    %44 = vector.shape_cast %43 : vector<1x4xf32> to vector<4xf32>
    %45 = arith.mulf %44, %39 : vector<4xf32>
    %c0_19 = arith.constant 0 : index
    %c0_20 = arith.constant 0 : index
    %46 = vector.load %arg3[%c0_19, %c0_20] : memref<2x4xf32, #tpu.memory_space<vmem>>, vector<1x4xf32>
    %47 = vector.shape_cast %46 : vector<1x4xf32> to vector<4xf32>
    %48 = arith.mulf %19, %42 : vector<4xf32>
    %49 = arith.subf %47, %48 : vector<4xf32>
    %c1_21 = arith.constant 1 : index
    %c0_22 = arith.constant 0 : index
    %50 = vector.load %arg3[%c1_21, %c0_22] : memref<2x4xf32, #tpu.memory_space<vmem>>, vector<1x4xf32>
    %51 = vector.shape_cast %50 : vector<1x4xf32> to vector<4xf32>
    %52 = arith.mulf %21, %45 : vector<4xf32>
    %53 = arith.subf %51, %52 : vector<4xf32>
    %54 = vector.shape_cast %42 : vector<4xf32> to vector<4x1xf32>
    %55 = vector.shape_cast %45 : vector<4xf32> to vector<4x1xf32>
    %56 = vector.shape_cast %54 : vector<4x1xf32> to vector<4x1xf32>
    %57 = vector.broadcast %56 : vector<4x1xf32> to vector<4x32xf32>
    %58 = vector.shape_cast %55 : vector<4x1xf32> to vector<4x1xf32>
    %59 = vector.broadcast %58 : vector<4x1xf32> to vector<4x32xf32>
    %60 = arith.select %8, %57, %59 : vector<4x32xi1>, vector<4x32xf32>
    %61 = vector.shape_cast %49 : vector<4xf32> to vector<4x1xf32>
    %62 = vector.shape_cast %53 : vector<4xf32> to vector<4x1xf32>
    %63 = vector.shape_cast %61 : vector<4x1xf32> to vector<4x1xf32>
    %64 = vector.broadcast %63 : vector<4x1xf32> to vector<4x32xf32>
    %65 = vector.shape_cast %62 : vector<4x1xf32> to vector<4x1xf32>
    %66 = vector.broadcast %65 : vector<4x1xf32> to vector<4x32xf32>
    %67 = arith.select %8, %64, %66 : vector<4x32xi1>, vector<4x32xf32>
    %68 = vector.shape_cast %60 : vector<4x32xf32> to vector<1x4x32xf32>
    %69 = vector.broadcast %68 : vector<1x4x32xf32> to vector<2x4x32xf32>
    %70 = arith.mulf %0, %69 : vector<2x4x32xf32>
    %71 = vector.shape_cast %67 : vector<4x32xf32> to vector<1x4x32xf32>
    %72 = vector.broadcast %71 : vector<1x4x32xf32> to vector<2x4x32xf32>
    %73 = arith.addf %70, %72 : vector<2x4x32xf32>
    %c0_23 = arith.constant 0 : index
    %c0_24 = arith.constant 0 : index
    %c0_25 = arith.constant 0 : index
    %74 = vector.load %arg4[%c0_23, %c0_24, %c0_25] : memref<2x4x32xf32, #tpu.memory_space<vmem>>, vector<2x4x32xf32>
    tpu.vector_store %arg4[%c0_23, %c0_24, %c0_25], %73 {strides = array<i32>} : memref<2x4x32xf32, #tpu.memory_space<vmem>>, vector<2x4x32xf32>,
    return
  }
  func.func @transform_0(%arg0: i32) -> (i32, i32, i32) {
    %c0_i32 = arith.constant 0 : i32
    %c0_i32_0 = arith.constant 0 : i32
    %c0_i32_1 = arith.constant 0 : i32
    %c0_i32_2 = arith.constant 0 : i32
    return %c0_i32, %c0_i32_0, %c0_i32_1 : i32, i32, i32
  }
  func.func @transform_1(%arg0: i32) -> (i32, i32) {
    %c0_i32 = arith.constant 0 : i32
    %c0_i32_0 = arith.constant 0 : i32
    %c0_i32_1 = arith.constant 0 : i32
    return %c0_i32, %c0_i32_0 : i32, i32
  }
  func.func @transform_2(%arg0: i32) -> (i32, i32) {
    %c0_i32 = arith.constant 0 : i32
    %c0_i32_0 = arith.constant 0 : i32
    %c0_i32_1 = arith.constant 0 : i32
    return %c0_i32, %c0_i32_0 : i32, i32
  }
  func.func @transform_3(%arg0: i32) -> (i32, i32, i32) {
    %c0_i32 = arith.constant 0 : i32
    %c0_i32_0 = arith.constant 0 : i32
    %c0_i32_1 = arith.constant 0 : i32
    %c0_i32_2 = arith.constant 0 : i32
    return %c0_i32, %c0_i32_0, %c0_i32_1 : i32, i32, i32
  }
}

</mosaic_0001>

<llo_original>
// kernel: tpu_custom_call.1
$region0: #{tpu_custom_call.1}
  #allocation0 [shape = 'u32[]', space=smem, size = 0x4, offset = 0x4, fixed_abs, tag = 'smem constant byte address 0x4 - core index']
  #allocation1 [shape = 'u32[72,128]{1,0:T(1,128)}', space=vmem, size = 0x9000, scoped, tag = 'internal scratch']
  %s0 = inlined_call_operand.hbm [shape: f32[2,4,32], index: 0, kind: input, shape index: {}]
  %s1 = inlined_call_operand.hbm [shape: f32[2,4], index: 1, kind: input, shape index: {}]
  %s2 = inlined_call_operand.hbm [shape: f32[2,4], index: 2, kind: input, shape index: {}]
  %s3 = inlined_call_operand.hbm [shape: f32[2,4,32], index: 3, kind: output, shape index: {}]
  %s4 = sld [smem:[#allocation0]]
  $region34: #{tpu_custom_call.1} parent=0
    _
  %s6 = ssub.s32 1, %s4
  %s7 = scalar_select 0, %s6, %s4
  $region1: #{tpu_custom_call.1} parent=0
    #allocation2 [shape = 'u8[4096]{0}', space=vmem, size = 0x1000, scoped, tag = 'input window, operand 0, single buffered']
    #allocation3 [shape = 's32[1]{0}', space=sflag, size = 0x4, scoped, tag = 'scoped memory for tpu_custom_call.1']
    #allocation4 [shape = 's32[1]{0}', space=sflag, size = 0x4, scoped, tag = 'scoped memory for tpu_custom_call.1']
    #allocation5 [shape = 'u8[1024]{0}', space=vmem, size = 0x400, scoped, tag = 'input window, operand 1, single buffered']
    #allocation6 [shape = 's32[1]{0}', space=sflag, size = 0x4, scoped, tag = 'scoped memory for tpu_custom_call.1']
    #allocation7 [shape = 'u8[1024]{0}', space=vmem, size = 0x400, scoped, tag = 'input window, operand 2, single buffered']
    #allocation8 [shape = 'u8[4096]{0}', space=vmem, size = 0x1000, scoped, tag = 'output window, operand 0, single buffered']
    %8 = vsyncpa [#allocation3], 0
    %9 = vsyncpa [#allocation6], 0
    %10 = vsyncpa [#allocation4], 0
    // Predicated region
    $region2: #{tpu_custom_call.1} parent=1 // pred_check
      _
    $region3: #{tpu_custom_call.1} parent=1 // pred_check_branch
      %12 = sbr.rel (0) target = $region5
    $region4: #{tpu_custom_call.1} parent=1 // pred_region
      %14 = vsyncadd [#allocation3], 0
      %s15 = sshll.u32 %s0, 4
      %s16 = int_to_ptr.hbm [resolvable:$true] %s15
      %s17 = sshll.u32 [#allocation2], 4
      %s18 = int_to_ptr.vmem [resolvable:$true] %s17
      %23 = dma.hbm_to_vmem [thread:$0]  %s16, 128, %s18, [#allocation3], 64, 64, 4
    $region5: #{tpu_custom_call.1} parent=1 // pred_fallthru
      _
    // Predicated region
    $region6: #{tpu_custom_call.1} parent=1 // pred_check
      _
    $region7: #{tpu_custom_call.1} parent=1 // pred_check_branch
      %25 = sbr.rel (0) target = $region9
    $region8: #{tpu_custom_call.1} parent=1 // pred_region
      %27 = vsyncadd [#allocation6], 0
      %s29 = sshll.u32 %s1, 4
      %s30 = int_to_ptr.hbm [resolvable:$true] %s29
      %s31 = sshll.u32 [#allocation5], 4
      %s32 = int_to_ptr.vmem [resolvable:$true] %s31
      %34 = dma.hbm_to_vmem [thread:$0]  %s30, 32, %s32, [#allocation6]
    $region9: #{tpu_custom_call.1} parent=1 // pred_fallthru
      _
    // Predicated region
    $region10: #{tpu_custom_call.1} parent=1 // pred_check
      _
    $region11: #{tpu_custom_call.1} parent=1 // pred_check_branch
      %36 = sbr.rel (0) target = $region13
    $region12: #{tpu_custom_call.1} parent=1 // pred_region
      %38 = vsyncadd [#allocation6], 0
      %s40 = sshll.u32 %s2, 4
      %s41 = int_to_ptr.hbm [resolvable:$true] %s40
      %s42 = sshll.u32 [#allocation7], 4
      %s43 = int_to_ptr.vmem [resolvable:$true] %s42
      %45 = dma.hbm_to_vmem [thread:$0]  %s41, 32, %s43, [#allocation6]
    $region13: #{tpu_custom_call.1} parent=1 // pred_fallthru
      _
    // Predicated region
    $region14: #{tpu_custom_call.1} parent=1 // pred_check
      _
    $region15: #{tpu_custom_call.1} parent=1 // pred_check_branch
      %47 = sbr.rel (0) target = $region17
    $region16: #{tpu_custom_call.1} parent=1 // pred_region
      %49 = dma.done [#allocation3], 128
    $region17: #{tpu_custom_call.1} parent=1 // pred_fallthru
      _
    // Predicated region
    $region18: #{tpu_custom_call.1} parent=1 // pred_check
      _
    $region19: #{tpu_custom_call.1} parent=1 // pred_check_branch
      %51 = sbr.rel (0) target = $region21
    $region20: #{tpu_custom_call.1} parent=1 // pred_region
      %53 = dma.done [#allocation6], 32
    $region21: #{tpu_custom_call.1} parent=1 // pred_fallthru
      _
    // Predicated region
    $region22: #{tpu_custom_call.1} parent=1 // pred_check
      _
    $region23: #{tpu_custom_call.1} parent=1 // pred_check_branch
      %55 = sbr.rel (0) target = $region25
    $region24: #{tpu_custom_call.1} parent=1 // pred_region
      %57 = dma.done [#allocation6], 32
    $region25: #{tpu_custom_call.1} parent=1 // pred_fallthru
      _
    %v58 = vld [vmem:[#allocation2] sm:$0xf]
    %v59 = vld [vmem:[#allocation2 + $0x4] sm:$0xf]
    %vm60 = vcmask 257024
    %v61 = vsel %vm60, %v58, 0.0
    %v62 = vsel %vm60, %v59, 0.0
    %v63 = vadd.f32 %v61, %v62
    %v64 = vmul.f32 %v58, %v58
    %v65 = vmul.f32 %v59, %v59
    %v66 = vsel %vm60, %v64, 0.0
    %v67 = vsel %vm60, %v65, 0.0
    %v68 = vadd.f32 %v66, %v67
    %v69 = vlaneseq
    %v70 = vand.u32 %v69, 127
    %v71 = vand.u32 %v70, 1
    %vm72 = vcmp.eq.s32.totalorder %v71, 0
    %v73 = vsel %vm72, %v63, 0.0
    %v74 = vsel %vm60, %v73, 0.0
    %75 = vadd.xlane.f32.xlu0 %v74
    %v76 = vpop.xlane.xlu0 %75
    %v77 = vsel %vm60, %v63, 0.0
    %78 = vadd.xlane.f32.xlu0 %v77
    %v79 = vpop.xlane.xlu0 %78
    %v80 = vsel %vm72, %v68, 0.0
    %v81 = vsel %vm60, %v80, 0.0
    %82 = vadd.xlane.f32.xlu0 %v81
    %v83 = vpop.xlane.xlu0 %82
    %v84 = vsel %vm60, %v68, 0.0
    %85 = vadd.xlane.f32.xlu0 %v84
    %v86 = vpop.xlane.xlu0 %85
    %v87 = vsub.f32 %v79, %v76
    %v88 = vsub.f32 %v86, %v83
    %v89 = vmul.f32 %v76, 0.03125
    %v90 = vmul.f32 %v87, 0.03125
    %v91 = vmul.f32 %v83, 0.03125
    %v92 = vmul.f32 %v89, %v89
    %v93 = vsub.f32 %v91, %v92
    %v94 = vmax.f32 %v93, 0.0
    %v95 = vmul.f32 %v88, 0.03125
    %v96 = vmul.f32 %v90, %v90
    %v97 = vsub.f32 %v95, %v96
    %v98 = vmax.f32 %v97, 0.0
    %v99 = vadd.f32 %v94, 1e-05
    %v100 = vrsqrt.pop %v99
    %v101 = vmul.f32 %v100, %v99
    %v102 = vmul.f32 %v101, %v100
    %v103 = vmul.f32 0.5, %v102
    %v104 = vsub.f32 1.5, %v103
    %v105 = vmul.f32 %v100, %v104
    %vm106 = vweird.f32 %v99
    %vm107 = vweird.f32 %v100
    %vm108 = vmor %vm106, %vm107
    %v109 = vsel %vm108, %v100, %v105
    %v110 = vadd.f32 %v98, 1e-05
    %v111 = vrsqrt.pop %v110
    %v112 = vmul.f32 %v111, %v110
    %v113 = vmul.f32 %v112, %v111
    %v114 = vmul.f32 0.5, %v113
    %v115 = vsub.f32 1.5, %v114
    %v116 = vmul.f32 %v111, %v115
    %vm117 = vweird.f32 %v110
    %vm118 = vweird.f32 %v111
    %vm119 = vmor %vm117, %vm118
    %v120 = vsel %vm119, %v111, %v116
    %v121 = vld [vmem:[#allocation5] sm:$0x1]
    %v123 = vperm.slane %v109, %v70
    %v125 = vmul.f32 %v121, %v123
    %v126 = vld [vmem:[#allocation5 + $0x1] sm:$0x1]
    %v128 = vperm.slane %v120, %v70
    %v130 = vmul.f32 %v126, %v128
    %v131 = vld [vmem:[#allocation7] sm:$0x1]
    %v133 = vperm.slane %v125, 0
    %v134 = vlaneseq
    %v135 = vshrl.u32 %v134, 7
    %137 = vset.pattern.permute.xlu0 %v135
    %138 = vperm.xlu0 %137, %v133
    %v139 = vpop.permute.xlu0 %138
    %v141 = vmul.f32 %v89, %v139
    %143 = vset.pattern.permute.xlu0 0
    %144 = vperm.xlu0 %143, %v141
    %v145 = vpop.permute.xlu0 %144
    %v146 = vperm.slane %v145, %v70
    %v148 = vsub.f32 %v131, %v146
    %v149 = vld [vmem:[#allocation7 + $0x1] sm:$0x1]
    %v151 = vperm.slane %v130, 0
    %v152 = vlaneseq
    %v153 = vshrl.u32 %v152, 7
    %155 = vset.pattern.permute.xlu0 %v153
    %156 = vperm.xlu0 %155, %v151
    %v157 = vpop.permute.xlu0 %156
    %v159 = vmul.f32 %v90, %v157
    %161 = vset.pattern.permute.xlu0 0
    %162 = vperm.xlu0 %161, %v159
    %v163 = vpop.permute.xlu0 %162
    %v164 = vperm.slane %v163, %v70
    %v166 = vsub.f32 %v149, %v164
    %v167 = vperm.slane %v125, 0
    %v168 = vlaneseq
    %v169 = vshrl.u32 %v168, 7
    %171 = vset.pattern.permute.xlu0 %v169
    %172 = vperm.xlu0 %171, %v167
    %v173 = vpop.permute.xlu0 %172
    %v174 = vperm.slane %v130, 0
    %v175 = vlaneseq
    %v176 = vshrl.u32 %v175, 7
    %178 = vset.pattern.permute.xlu0 %v176
    %179 = vperm.xlu0 %178, %v174
    %v180 = vpop.permute.xlu0 %179
    %v181 = vsel %vm72, %v173, %v180
    %v182 = vperm.slane %v148, 0
    %v183 = vlaneseq
    %v184 = vshrl.u32 %v183, 7
    %186 = vset.pattern.permute.xlu0 %v184
    %187 = vperm.xlu0 %186, %v182
    %v188 = vpop.permute.xlu0 %187
    %v189 = vperm.slane %v166, 0
    %v190 = vlaneseq
    %v191 = vshrl.u32 %v190, 7
    %193 = vset.pattern.permute.xlu0 %v191
    %194 = vperm.xlu0 %193, %v189
    %v195 = vpop.permute.xlu0 %194
    %v196 = vsel %vm72, %v188, %v195
    %v197 = vmul.f32 %v58, %v181
    %v198 = vmul.f32 %v59, %v181
    %v199 = vadd.f32 %v197, %v196
    %v200 = vadd.f32 %v198, %v196
    %201 = vst.msk [vmem:[#allocation8] sm:$0xf] %vm60, %v199
    %202 = vst.msk [vmem:[#allocation8 + $0x4] sm:$0xf] %vm60, %v200
    // Predicated region
    $region26: #{tpu_custom_call.1} parent=1 // pred_check
      _
    $region27: #{tpu_custom_call.1} parent=1 // pred_check_branch
      %204 = sbr.rel (0) target = $region29
    $region28: #{tpu_custom_call.1} parent=1 // pred_region
      %206 = vsyncadd [#allocation4], 0
      %s207 = sshll.u32 [#allocation8], 4
      %s208 = int_to_ptr.vmem [resolvable:$true] %s207
      %s209 = sshll.u32 %s3, 4
      %s210 = int_to_ptr.hbm [resolvable:$true] %s209
      %215 = dma.vmem_to_hbm [thread:$0]  %s208, 128, %s210, [#allocation4], 64, 64, 4
    $region29: #{tpu_custom_call.1} parent=1 // pred_fallthru
      _
    // Predicated region
    $region30: #{tpu_custom_call.1} parent=1 // pred_check
      _
    $region31: #{tpu_custom_call.1} parent=1 // pred_check_branch
      %217 = sbr.rel (0) target = $region33
    $region32: #{tpu_custom_call.1} parent=1 // pred_region
      %219 = dma.done [#allocation4], 128
    $region33: #{tpu_custom_call.1} parent=1 // pred_fallthru
      _
    %220 = vsyncpa [#allocation3], 1
    %221 = vsyncpa [#allocation6], 1
    %222 = vsyncpa [#allocation4], 1

</llo_original>
